<compile_context>
chip_gen: v7x
topology: tpu7x:2x2x1
jax: 0.10.0
libtpu: 0.0.40
codegen_flags: <defaults>
</compile_context>

<pallas_src>
import jax
import jax.numpy as jnp
from jax.experimental import pallas as pl
from jax.experimental.pallas import tpu as pltpu


# ---------------------------------------------------------------------------
# Kernel bodies
# ---------------------------------------------------------------------------

def _fire_and_reset(v, v_threshold, v_reset, spike_dtype):
    """neuronal_fire + neuronal_reset on an already-integrated v.

    Reset is computed from the boolean fire mask (exact for spike in {0,1}),
    so the emitted spike dtype is free to be narrower than v's dtype.
    """
    fire = v >= v_threshold
    spike = fire.astype(spike_dtype)
    if v_reset is None:
        v_new = v - fire.astype(v.dtype) * jnp.asarray(v_threshold, v.dtype)   # soft
    else:
        v_new = jnp.where(fire, jnp.asarray(v_reset, v.dtype), v)              # hard
    return spike, v_new


def _make_simple_kernel_const_v(v_threshold, v_reset, v_init):
    """First-call variant: v is a compile-time constant, no v input stream."""
    def kernel(x_ref, spike_ref, v_out_ref):
        v = x_ref[...] + v_init                       # neuronal_dynamics (IF)
        spike, v_new = _fire_and_reset(v, v_threshold, v_reset, spike_ref.dtype)
        spike_ref[...] = spike
        v_out_ref[...] = v_new
    return kernel


def _make_simple_kernel_state_v(v_threshold, v_reset):
    """Steady-state variant: v is a tensor, aliased + donated -> in-place update."""
    def kernel(x_ref, v_ref, spike_ref, v_out_ref):
        v = v_ref[...] + x_ref[...]                   # neuronal_dynamics (IF)
        spike, v_new = _fire_and_reset(v, v_threshold, v_reset, spike_ref.dtype)
        spike_ref[...] = spike
        v_out_ref[...] = v_new
    return kernel


def _make_seq_kernel_const_v(v_threshold, v_reset, v_init):
    """Fused T-step variant, constant initial v.  v lives in the v_out block,
    which stays VMEM-resident across the trailing 'arbitrary' T grid axis."""
    def kernel(x_ref, spike_ref, v_out_ref):
        @pl.when(pl.program_id(1) == 0)
        def _():
            v_out_ref[...] = jnp.full(v_out_ref.shape, v_init, v_out_ref.dtype)
        v = v_out_ref[...] + x_ref[...]
        spike, v_new = _fire_and_reset(v, v_threshold, v_reset, spike_ref.dtype)
        spike_ref[...] = spike
        v_out_ref[...] = v_new                        # carried to next t; written
    return kernel                                     # back to HBM once per row block


def _make_seq_kernel_state_v(v_threshold, v_reset):
    """Fused T-step variant, tensor initial v (aliased + donated)."""
    def kernel(x_ref, v_ref, spike_ref, v_out_ref):
        @pl.when(pl.program_id(1) == 0)
        def _():
            v_out_ref[...] = v_ref[...]
        v = v_out_ref[...] + x_ref[...]
        spike, v_new = _fire_and_reset(v, v_threshold, v_reset, spike_ref.dtype)
        spike_ref[...] = spike
        v_out_ref[...] = v_new
    return kernel


# ---------------------------------------------------------------------------
# Layout selection: lane-dense 2D slab, ~1 MiB blocks, >= 2-4 grid steps
# ---------------------------------------------------------------------------

_TARGET_BLOCK_BYTES = 1 << 20     # ~1 MiB per-operand block (~85% of HBM roofline)
_MIN_BLOCK_BYTES = 256 << 10      # don't shatter big tensors into tiny blocks
_MIN_GRID_STEPS = 4               # pipeline depth + both v7x TensorCores
_VMEM_LIMIT_BYTES = 32 << 20      # explicit scoped-VMEM limit (v5e default is only 16 MiB)


def _choose_layout(total_elems, itemsize):
    """Return (lane, rows, tm, grid_m, padded_elems) for a flattened tensor."""
    # Widest lane in {1024,512,256,128} that divides the element count exactly:
    # avoiding the host-side pad copy of x beats the marginal 1024-vs-128 win.
    lane = 128
    for cand in (1024, 512, 256, 128):
        if total_elems % cand == 0:
            lane = cand
            break
    rows = -(-total_elems // lane)                    # exact unless 128 fallback
    bytes_total = rows * lane * itemsize

    # Tiny / awkward row counts: one whole-array block (block == full dims is
    # legal even when rows < 8); avoids any row padding.
    if rows < 16 or (rows % 8 != 0 and bytes_total <= 2 * _TARGET_BLOCK_BYTES):
        return lane, rows, rows, 1, rows * lane

    if rows % 8 != 0:                                 # large & ragged: pad rows
        rows = -(-rows // 8) * 8

    row_bytes = lane * itemsize
    max_tm = max(8, (_TARGET_BLOCK_BYTES // row_bytes) // 8 * 8)
    min_tm = min(max_tm, max(8, (_MIN_BLOCK_BYTES // row_bytes) // 8 * 8))

    # Aim for >= _MIN_GRID_STEPS steps (>= 2 on small row counts) so the
    # BlockSpec pipeline has depth and both v7x TensorCores get work.
    min_steps = _MIN_GRID_STEPS if rows >= 8 * _MIN_GRID_STEPS else 2
    hi = min(max_tm, max(8, (rows // min_steps) // 8 * 8))
    tm = 8
    t = hi
    while t >= 8:                                     # largest mult-of-8 divisor <= hi
        if rows % t == 0:
            tm = t
            break
        t -= 8

    # Pathological divisors would mean hundreds of tiny steps; pad rows instead
    # and use a comfortable block (one pad pass beats per-step overhead there).
    if tm * row_bytes < _MIN_BLOCK_BYTES and bytes_total >= _MIN_GRID_STEPS * _TARGET_BLOCK_BYTES:
        tm = min(max_tm, max(min_tm, (rows // _MIN_GRID_STEPS) // 8 * 8))
        rows = -(-rows // tm) * tm

    return lane, rows, tm, rows // tm, rows * lane


def _to_2d(x, total, lane, rows, padded):
    flat = jnp.reshape(x, (-1,))
    if padded != total:
        flat = jnp.pad(flat, (0, padded - total))
    return flat.reshape(rows, lane)


def _from_2d(arr2d, total, shape, padded):
    flat = arr2d.reshape(-1)
    if padded != total:
        flat = flat[:total]
    return flat.reshape(shape)


# ---------------------------------------------------------------------------
# Module wrapper
# ---------------------------------------------------------------------------

class BaseNodePallas:
    """Minimal JAX/Pallas port of snngrow BaseNode (IF dynamics, eval mode)."""

    def __init__(self, v_threshold: float = 1.0, v_reset=0.0,
                 detach_reset: bool = False, parallel_optim: bool = False,
                 T: int = 1, spike_out: bool = False, spike_dtype=None):
        assert isinstance(v_reset, float) or v_reset is None
        assert isinstance(v_threshold, float)
        self.v_threshold = v_threshold
        self.v_reset = v_reset
        self.detach_reset = detach_reset     # forward-only port: no effect
        self.parallel_optim = parallel_optim
        self.T = T
        self.spike_out = spike_out           # TODO(synk): SpikeTensor wrapper has no Pallas equivalent; plain dense spikes returned
        self.spike_dtype = None if spike_dtype is None else jnp.dtype(spike_dtype)
        # stateful membrane potential ("register_memory('v', ...)"):
        #   float  -> constant baked into the first-call kernel
        #   dict   -> {'v2d': (rows,lane) array, 'total', 'shape', 'lane', 'rows', 'padded'}
        self._v = 0.0 if v_reset is None else v_reset
        self._calls = {}                     # compiled-call cache

    # ----- stateful v: kept in kernel layout, materialized lazily ------------
    @property
    def v(self):
        if isinstance(self._v, float):
            return self._v
        st = self._v
        return _from_2d(st['v2d'], st['total'], st['shape'], st['padded'])

    @v.setter
    def v(self, value):
        if isinstance(value, (int, float)):
            self._v = float(value)
            return
        value = jnp.asarray(value)
        total = int(value.size)
        lane, rows, _, _, padded = _choose_layout(total, value.dtype.itemsize)
        self._v = dict(v2d=_to_2d(value, total, lane, rows, padded),
                       total=total, shape=tuple(value.shape),
                       lane=lane, rows=rows, padded=padded)

    def reset(self):
        self._v = 0.0 if self.v_reset is None else self.v_reset

    def _state_v2d(self, total, lane, rows, padded, dtype):
        st = self._v
        if (st['total'] == total and st['lane'] == lane and st['rows'] == rows
                and st['padded'] == padded and st['v2d'].dtype == dtype):
            return st['v2d']                 # already in the right layout: zero-copy
        v_full = jnp.asarray(self.v, dtype)  # rare fallback (user-assigned / dtype change)
        return _to_2d(v_full, total, lane, rows, padded)

    # ----- compiled-call cache ------------------------------------------------
    def _simple_call(self, with_state, rows, lane, tm, grid_m, dtype, spike_dtype, v_init):
        key = ("simple", with_state, rows, lane, tm, grid_m, str(dtype), str(spike_dtype), v_init)
        if key in self._calls:
            return self._calls[key]
        spec = pl.BlockSpec((tm, lane), lambda i: (i, 0))
        out_shape = (jax.ShapeDtypeStruct((rows, lane), spike_dtype),
                     jax.ShapeDtypeStruct((rows, lane), dtype))
        if with_state:
            kernel = _make_simple_kernel_state_v(self.v_threshold, self.v_reset)
            in_specs = [spec, spec]
            aliases = {1: 1}                 # v input -> v output
            donate = (1,)                    # + donate the buffer at the jit boundary
        else:
            kernel = _make_simple_kernel_const_v(self.v_threshold, self.v_reset, v_init)
            in_specs = [spec]
            aliases = {}
            donate = ()
        call = jax.jit(pl.pallas_call(
            kernel,
            out_shape=out_shape,
            grid_spec=pltpu.PrefetchScalarGridSpec(
                num_scalar_prefetch=0,
                grid=(grid_m,),
                in_specs=in_specs,
                out_specs=[spec, spec]),
            input_output_aliases=aliases,
            compiler_params=pltpu.CompilerParams(
                dimension_semantics=("parallel",),
                vmem_limit_bytes=_VMEM_LIMIT_BYTES),
        ), donate_argnums=donate)
        self._calls[key] = call
        return call

    def _seq_call(self, with_state, T, rows, lane, tm, grid_m, dtype, spike_dtype, v_init):
        key = ("seq", with_state, T, rows, lane, tm, grid_m, str(dtype), str(spike_dtype), v_init)
        if key in self._calls:
            return self._calls[key]
        x_spec = pl.BlockSpec((None, tm, lane), lambda i, t: (t, i, 0))  # T dim squeezed
        v_spec = pl.BlockSpec((tm, lane), lambda i, t: (i, 0))           # constant over t
        out_shape = (jax.ShapeDtypeStruct((T, rows, lane), spike_dtype),
                     jax.ShapeDtypeStruct((rows, lane), dtype))
        if with_state:
            kernel = _make_seq_kernel_state_v(self.v_threshold, self.v_reset)
            in_specs = [x_spec, v_spec]
            aliases = {1: 1}
            donate = (1,)
        else:
            kernel = _make_seq_kernel_const_v(self.v_threshold, self.v_reset, v_init)
            in_specs = [x_spec]
            aliases = {}
            donate = ()
        call = jax.jit(pl.pallas_call(
            kernel,
            out_shape=out_shape,
            grid_spec=pltpu.PrefetchScalarGridSpec(
                num_scalar_prefetch=0,
                grid=(grid_m, T),            # carried-state T axis last
                in_specs=in_specs,
                out_specs=[x_spec, v_spec]),
            input_output_aliases=aliases,
            compiler_params=pltpu.CompilerParams(
                dimension_semantics=("parallel", "arbitrary"),
                vmem_limit_bytes=_VMEM_LIMIT_BYTES),
        ), donate_argnums=donate)
        self._calls[key] = call
        return call

    # ----- forward paths ------------------------------------------------------
    def simple_forward(self, x):
        orig_shape = tuple(x.shape)
        dtype = x.dtype
        sdt = dtype if self.spike_dtype is None else self.spike_dtype
        total = int(x.size)
        lane, rows, tm, grid_m, padded = _choose_layout(total, dtype.itemsize)

        x2d = _to_2d(x, total, lane, rows, padded)

        if isinstance(self._v, float):
            # v_float_to_tensor: bake the constant in, skip the v input stream.
            call = self._simple_call(False, rows, lane, tm, grid_m, dtype, sdt, float(self._v))
            spike2d, v2d_new = call(x2d)
        else:
            v2d = self._state_v2d(total, lane, rows, padded, dtype)
            call = self._simple_call(True, rows, lane, tm, grid_m, dtype, sdt, None)
            spike2d, v2d_new = call(x2d, v2d)

        # Keep v in the kernel's 2-D layout; materialize orig_shape lazily via .v.
        self._v = dict(v2d=v2d_new, total=total, shape=orig_shape,
                       lane=lane, rows=rows, padded=padded)
        return _from_2d(spike2d, total, orig_shape, padded)

    def parallel_optim_forward(self, x_seq):
        # One fused pallas_call over all T timesteps; v is carried in VMEM
        # across the trailing grid axis instead of round-tripping HBM each step.
        x_shape = tuple(x_seq.shape)
        T = self.T
        batch = x_shape[0] // T
        step_shape = (batch,) + x_shape[1:]
        dtype = x_seq.dtype
        sdt = dtype if self.spike_dtype is None else self.spike_dtype
        per_step = int(x_seq.size) // T
        lane, rows, tm, grid_m, padded = _choose_layout(per_step, dtype.itemsize)

        x2 = x_seq.reshape(T, per_step)
        if padded != per_step:
            x2 = jnp.pad(x2, ((0, 0), (0, padded - per_step)))
        x3 = x2.reshape(T, rows, lane)

        if isinstance(self._v, float):
            call = self._seq_call(False, T, rows, lane, tm, grid_m, dtype, sdt, float(self._v))
            spike3, v2d_new = call(x3)
        else:
            v2d = self._state_v2d(per_step, lane, rows, padded, dtype)
            call = self._seq_call(True, T, rows, lane, tm, grid_m, dtype, sdt, None)
            spike3, v2d_new = call(x3, v2d)

        self._v = dict(v2d=v2d_new, total=per_step, shape=step_shape,
                       lane=lane, rows=rows, padded=padded)

        spike2 = spike3.reshape(T, padded)
        if padded != per_step:
            spike2 = spike2[:, :per_step]
        return spike2.reshape((T * batch,) + x_shape[1:])

    def __call__(self, x):
        if self.parallel_optim:
            return self.parallel_optim_forward(x)
        return self.simple_forward(x)


# ---------------------------------------------------------------------------
# Pure-JAX reference
# ---------------------------------------------------------------------------

def _ref_step(x, v, v_th, v_rst):
    v = v + x
    spike = (v >= v_th).astype(x.dtype)
    if v_rst is None:
        v_new = v - spike * v_th
    else:
        v_new = (1.0 - spike) * v + spike * v_rst
    return spike, v_new


if __name__ == "__main__":
    key = jax.random.PRNGKey(0)
    k1, k2, k3, k4 = jax.random.split(key, 4)
    N, C, H, W = 2, 4, 16, 16                        # NCHW, total = 2048
    x = jax.random.normal(k1, (N, C, H, W), dtype=jnp.float32) * 1.5

    # ---- simple (stateful) path: hard reset ---------------------------------
    node = BaseNodePallas(v_threshold=1.0, v_reset=0.0)
    spike1 = jax.block_until_ready(node(x))          # const-v kernel (no v stream)
    ref_s1, ref_v1 = _ref_step(x, jnp.zeros_like(x), 1.0, 0.0)
    assert spike1.shape == x.shape and spike1.dtype == x.dtype
    assert jnp.allclose(spike1, ref_s1)
    assert jnp.allclose(node.v, ref_v1)

    spike2 = jax.block_until_ready(node(x))          # stateful kernel (aliased + donated v)
    ref_s2, ref_v2 = _ref_step(x, ref_v1, 1.0, 0.0)
    assert jnp.allclose(spike2, ref_s2)
    assert jnp.allclose(node.v, ref_v2)

    # ---- fused multi-timestep (parallel_optim) path --------------------------
    T = 2
    x_seq = jax.random.normal(k2, (T * N, C, H, W), dtype=jnp.float32) * 1.5
    node_p = BaseNodePallas(v_threshold=1.0, v_reset=0.0, parallel_optim=True, T=T)
    spike_seq = jax.block_until_ready(node_p(x_seq))
    xs = x_seq.reshape(T, N, C, H, W)
    v_ref = jnp.zeros((N, C, H, W), jnp.float32)
    ref_steps = []
    for t in range(T):
        s, v_ref = _ref_step(xs[t], v_ref, 1.0, 0.0)
        ref_steps.append(s)
    ref_seq = jnp.stack(ref_steps, 0).reshape(T * N, C, H, W)
    assert spike_seq.shape == x_seq.shape
    assert jnp.allclose(spike_seq, ref_seq)
    assert jnp.allclose(node_p.v, v_ref)

    # ---- soft reset variant (v_reset=None) ------------------------------------
    node_s = BaseNodePallas(v_threshold=1.0, v_reset=None)
    spike_s = jax.block_until_ready(node_s(x))
    ref_ss, ref_vs = _ref_step(x, jnp.zeros_like(x), 1.0, None)
    assert jnp.allclose(spike_s, ref_ss)
    assert jnp.allclose(node_s.v, ref_vs)

    # ---- odd shape: exercises 128-lane fallback + padded tail ----------------
    x_odd = jax.random.normal(k3, (2, 5, 9, 7), dtype=jnp.float32) * 1.5
    node_o = BaseNodePallas(v_threshold=1.0, v_reset=0.0)
    so1 = jax.block_until_ready(node_o(x_odd))
    ro1, rv1 = _ref_step(x_odd, jnp.zeros_like(x_odd), 1.0, 0.0)
    so2 = jax.block_until_ready(node_o(x_odd))
    ro2, rv2 = _ref_step(x_odd, rv1, 1.0, 0.0)
    assert jnp.allclose(so1, ro1) and jnp.allclose(so2, ro2)
    assert jnp.allclose(node_o.v, rv2)

    # ---- mid-size shape: exercises the multi-step (grid_m >= 4) path ----------
    x_big = jax.random.normal(k4, (4, 16, 32, 32), dtype=jnp.float32) * 1.5
    node_b = BaseNodePallas(v_threshold=1.0, v_reset=0.0)
    sb1 = jax.block_until_ready(node_b(x_big))
    rb1, rbv1 = _ref_step(x_big, jnp.zeros_like(x_big), 1.0, 0.0)
    sb2 = jax.block_until_ready(node_b(x_big))
    rb2, rbv2 = _ref_step(x_big, rbv1, 1.0, 0.0)
    assert jnp.allclose(sb1, rb1) and jnp.allclose(sb2, rb2)
    assert jnp.allclose(node_b.v, rbv2)

    print("KERNEL_OK")
</pallas_src>

<mosaic_0001>
module attributes {stable_mosaic.version = 11 : i64} {
  func.func @kernel(%arg0: i32, %arg1: memref<2x1024xf32, #tpu.memory_space<vmem>>, %arg2: memref<2x1024xf32, #tpu.memory_space<vmem>>, %arg3: memref<2x1024xf32, #tpu.memory_space<vmem>>) attributes {dimension_semantics = [#tpu.dimension_semantics<parallel>], iteration_bounds = array<i64: 1>, scalar_prefetch = 0 : i64, scratch_operands = 0 : i64, tpu.core_type = #tpu.core_type<tc>, window_params = [{transform_indices = @transform_0, window_bounds = array<i64: 2, 1024>}, {transform_indices = @transform_1, window_bounds = array<i64: 2, 1024>}, {transform_indices = @transform_2, window_bounds = array<i64: 2, 1024>}]} {
    %c0 = arith.constant 0 : index
    %c0_0 = arith.constant 0 : index
    %0 = vector.load %arg1[%c0, %c0_0] : memref<2x1024xf32, #tpu.memory_space<vmem>>, vector<2x1024xf32>
    %cst = arith.constant 0.000000e+00 : f32
    %1 = vector.broadcast %cst : f32 to vector<2x1024xf32>
    %2 = arith.addf %0, %1 : vector<2x1024xf32>
    %cst_1 = arith.constant 1.000000e+00 : f32
    %3 = vector.broadcast %cst_1 : f32 to vector<2x1024xf32>
    %4 = arith.cmpf oge, %2, %3 : vector<2x1024xf32>
    %5 = arith.extui %4 : vector<2x1024xi1> to vector<2x1024xi32>
    %6 = arith.sitofp %5 : vector<2x1024xi32> to vector<2x1024xf32>
    %cst_2 = arith.constant 0.000000e+00 : f32
    %7 = vector.broadcast %cst_2 : f32 to vector<2x1024xf32>
    %8 = arith.select %4, %7, %2 : vector<2x1024xi1>, vector<2x1024xf32>
    %c0_3 = arith.constant 0 : index
    %c0_4 = arith.constant 0 : index
    %9 = vector.load %arg2[%c0_3, %c0_4] : memref<2x1024xf32, #tpu.memory_space<vmem>>, vector<2x1024xf32>
    tpu.vector_store %arg2[%c0_3, %c0_4], %6 {strides = array<i32>} : memref<2x1024xf32, #tpu.memory_space<vmem>>, vector<2x1024xf32>,
    %c0_5 = arith.constant 0 : index
    %c0_6 = arith.constant 0 : index
    %10 = vector.load %arg3[%c0_5, %c0_6] : memref<2x1024xf32, #tpu.memory_space<vmem>>, vector<2x1024xf32>
    tpu.vector_store %arg3[%c0_5, %c0_6], %8 {strides = array<i32>} : memref<2x1024xf32, #tpu.memory_space<vmem>>, vector<2x1024xf32>,
    return
  }
  func.func @transform_0(%arg0: i32) -> (i32, i32) {
    %c0_i32 = arith.constant 0 : i32
    %c0_i32_0 = arith.constant 0 : i32
    return %arg0, %c0_i32 : i32, i32
  }
  func.func @transform_1(%arg0: i32) -> (i32, i32) {
    %c0_i32 = arith.constant 0 : i32
    %c0_i32_0 = arith.constant 0 : i32
    return %arg0, %c0_i32 : i32, i32
  }
  func.func @transform_2(%arg0: i32) -> (i32, i32) {
    %c0_i32 = arith.constant 0 : i32
    %c0_i32_0 = arith.constant 0 : i32
    return %arg0, %c0_i32 : i32, i32
  }
}

</mosaic_0001>

<llo_original>
// kernel: tpu_custom_call.1
$region0: #{tpu_custom_call.1}
  #allocation0 [shape = 'u32[]', space=smem, size = 0x4, offset = 0x4, fixed_abs, tag = 'smem constant byte address 0x4 - core index']
  #allocation1 [shape = 'u32[144,128]{1,0:T(1,128)}', space=vmem, size = 0x12000, scoped, tag = 'internal scratch']
  %s0 = inlined_call_operand.hbm [shape: f32[2,1024], index: 0, kind: input, shape index: {}]
  %s1 = inlined_call_operand.hbm [shape: f32[2,1024], index: 1, kind: output, shape index: {0}]
  %s2 = inlined_call_operand.hbm [shape: f32[2,1024], index: 2, kind: output, shape index: {1}]
  %3 = xla_tuple %s1, %s2
  %s4 = sld [smem:[#allocation0]]
  $region26: #{tpu_custom_call.1} parent=0
    _
  %s6 = ssub.s32 1, %s4
  %s7 = scalar_select 0, %s6, %s4
  $region1: #{tpu_custom_call.1} parent=0
    #allocation2 [shape = 'u8[8192]{0}', space=vmem, size = 0x2000, scoped, tag = 'input window, operand 0, single buffered']
    #allocation3 [shape = 's32[1]{0}', space=sflag, size = 0x4, scoped, tag = 'scoped memory for tpu_custom_call.1']
    #allocation4 [shape = 's32[1]{0}', space=sflag, size = 0x4, scoped, tag = 'scoped memory for tpu_custom_call.1']
    #allocation5 [shape = 'u8[8192]{0}', space=vmem, size = 0x2000, scoped, tag = 'output window, operand 0, single buffered']
    #allocation6 [shape = 'u8[8192]{0}', space=vmem, size = 0x2000, scoped, tag = 'output window, operand 1, single buffered']
    #allocation7 [shape = 's32[1]{0}', space=sflag, size = 0x4, scoped, tag = 'scoped memory for tpu_custom_call.1']
    %8 = vsyncpa [#allocation3], 0
    %9 = vsyncpa [#allocation4], 0
    %10 = vsyncpa [#allocation7], 0
    // Predicated region
    $region2: #{tpu_custom_call.1} parent=1 // pred_check
      _
    $region3: #{tpu_custom_call.1} parent=1 // pred_check_branch
      %12 = sbr.rel (0) target = $region5
    $region4: #{tpu_custom_call.1} parent=1 // pred_region
      %s14 = ssub.s32 256, 256
      %15 = vsyncadd [#allocation3], %s14
      %s17 = sshll.u32 [#allocation2], 4
      %s18 = int_to_ptr.vmem [resolvable:$true] %s17
      %20 = dma.hbm_to_vmem [thread:$0]  %s0, 256, %s18, [#allocation3]
    $region5: #{tpu_custom_call.1} parent=1 // pred_fallthru
      _
    // Predicated region
    $region6: #{tpu_custom_call.1} parent=1 // pred_check
      _
    $region7: #{tpu_custom_call.1} parent=1 // pred_check_branch
      %22 = sbr.rel (0) target = $region9
    $region8: #{tpu_custom_call.1} parent=1 // pred_region
      %23 = dma.done [#allocation3], 256
    $region9: #{tpu_custom_call.1} parent=1 // pred_fallthru
      _
    %v24 = vld [vmem:[#allocation2] sm:$0xff]
    %v25 = vld [vmem:[#allocation2 + $0x8] sm:$0xff]
    %v26 = vadd.f32 %v24, 0.0
    %v27 = vadd.f32 %v25, 0.0
    %vm28 = vcmp.ge.f32.partialorder %v26, 1.0
    %vm29 = vcmp.ge.f32.partialorder %v27, 1.0
    %v30 = vsel %vm28, 1, 0
    %v31 = vsel %vm29, 1, 0
    %v32 = vcvt.s32.f32 %v30
    %v33 = vcvt.s32.f32 %v31
    %v34 = vsel %vm28, 0.0, %v26
    %v35 = vsel %vm29, 0.0, %v27
    %36 = vst [vmem:[#allocation5] sm:$0xff] %v32
    %37 = vst [vmem:[#allocation5 + $0x8] sm:$0xff] %v33
    %38 = vst [vmem:[#allocation6] sm:$0xff] %v34
    %39 = vst [vmem:[#allocation6 + $0x8] sm:$0xff] %v35
    // Predicated region
    $region10: #{tpu_custom_call.1} parent=1 // pred_check
      _
    $region11: #{tpu_custom_call.1} parent=1 // pred_check_branch
      %41 = sbr.rel (0) target = $region13
    $region12: #{tpu_custom_call.1} parent=1 // pred_region
      %s43 = ssub.s32 256, 256
      %44 = vsyncadd [#allocation4], %s43
      %s46 = sshll.u32 [#allocation5], 4
      %s47 = int_to_ptr.vmem [resolvable:$true] %s46
      %49 = dma.vmem_to_hbm [thread:$0]  %s47, 256, %s1, [#allocation4]
    $region13: #{tpu_custom_call.1} parent=1 // pred_fallthru
      _
    // Predicated region
    $region14: #{tpu_custom_call.1} parent=1 // pred_check
      _
    $region15: #{tpu_custom_call.1} parent=1 // pred_check_branch
      %51 = sbr.rel (0) target = $region17
    $region16: #{tpu_custom_call.1} parent=1 // pred_region
      %s53 = ssub.s32 256, 256
      %54 = vsyncadd [#allocation7], %s53
      %s56 = sshll.u32 [#allocation6], 4
      %s57 = int_to_ptr.vmem [resolvable:$true] %s56
      %59 = dma.vmem_to_hbm [thread:$0]  %s57, 256, %s2, [#allocation7]
    $region17: #{tpu_custom_call.1} parent=1 // pred_fallthru
      _
    // Predicated region
    $region18: #{tpu_custom_call.1} parent=1 // pred_check
      _
    $region19: #{tpu_custom_call.1} parent=1 // pred_check_branch
      %61 = sbr.rel (0) target = $region21
    $region20: #{tpu_custom_call.1} parent=1 // pred_region
      %62 = dma.done [#allocation4], 256
    $region21: #{tpu_custom_call.1} parent=1 // pred_fallthru
      _
    // Predicated region
    $region22: #{tpu_custom_call.1} parent=1 // pred_check
      _
    $region23: #{tpu_custom_call.1} parent=1 // pred_check_branch
      %64 = sbr.rel (0) target = $region25
    $region24: #{tpu_custom_call.1} parent=1 // pred_region
      %65 = dma.done [#allocation7], 256
    $region25: #{tpu_custom_call.1} parent=1 // pred_fallthru
      _
    %66 = vsyncpa [#allocation3], 1
    %67 = vsyncpa [#allocation4], 1
    %68 = vsyncpa [#allocation7], 1

</llo_original>
